<compile_context>
chip_gen: v7x
topology: tpu7x:2x2x1
jax: 0.10.0
libtpu: 0.0.40
codegen_flags: <defaults>
</compile_context>

<pallas_src>
import functools

import jax
import jax.numpy as jnp
from jax import lax
from jax.experimental import pallas as pl
from jax.experimental.pallas import tpu as pltpu


def _embedding2pixel_kernel(x_ref, w_ref, b_ref, o_ref):
    # x_ref: (tm, E)   w_ref: (C, E)   b_ref: (C, 1)   o_ref: (C, tm)
    # Transposed matmul: contract over E -> (C, tm), lane-dense along tm.
    acc = lax.dot_general(
        w_ref[...], x_ref[...],
        dimension_numbers=(((1,), (1,)), ((), ())),
        preferred_element_type=jnp.float32,
    )
    o_ref[...] = (acc + b_ref[...]).astype(o_ref.dtype)


def _choose_row_tile(seq, emb, itemsize):
    """Pick a pixel-tile big enough to amortize per-grid-step overhead.

    Targets ~2 MiB of X per block (double-buffered -> ~4 MiB), keeps the tile
    a multiple of 128 (it is the lane axis of the output block) and an exact
    divisor of `seq` so the last grid step is never a masked partial block.
    """
    target_bytes = 2 * 1024 * 1024
    tm = target_bytes // max(1, emb * itemsize)
    if tm >= seq:
        return seq                           # single block along the pixel axis
    tm = max(128, (tm // 128) * 128)
    while seq % tm != 0 and tm > 128:         # avoid a masked tail block
        tm -= 128
    if seq % tm != 0:
        tm = seq
    return tm


@functools.partial(jax.jit, static_argnames=("image_size",))
def embedding2pixel_forward(x, weight, bias, *, image_size):
    """x: (B, H*W, E), weight: (C, E), bias: (C,) -> (B, C, H, W) (NCHW)."""
    B, S, E = x.shape
    C = weight.shape[0]
    assert S == image_size * image_size

    itemsize = jnp.dtype(x.dtype).itemsize
    tm = _choose_row_tile(S, E, itemsize)
    grid = (B, S // tm)

    bias2d = bias.reshape(C, 1)

    # Advisory cost hint: this op is entirely HBM-bound.
    flops = 2 * B * S * E * C
    bytes_accessed = (B * S * E + C * E + C + B * S * C) * itemsize

    # VMEM budget: double-buffered X tile + double-buffered output tile +
    # resident weight/bias, with headroom; clamp well under v7x's 64 MiB.
    vmem_need = (2 * tm * E + 2 * C * tm + C * E + C) * itemsize
    vmem_limit = int(min(max(2 * vmem_need, 8 << 20), 48 << 20))

    y = pl.pallas_call(
        _embedding2pixel_kernel,
        out_shape=jax.ShapeDtypeStruct((B, C, S), x.dtype),
        grid=grid,
        in_specs=[
            pl.BlockSpec((None, tm, E), lambda b, i: (b, i, 0)),   # X pixel tile
            pl.BlockSpec((C, E), lambda b, i: (0, 0)),             # full weight
            pl.BlockSpec((C, 1), lambda b, i: (0, 0)),             # full bias
        ],
        out_specs=pl.BlockSpec((None, C, tm), lambda b, i: (b, 0, i)),
        compiler_params=pltpu.CompilerParams(
            dimension_semantics=("parallel", "parallel"),
            vmem_limit_bytes=vmem_limit,
        ),
        cost_estimate=pl.CostEstimate(
            flops=flops, transcendentals=0, bytes_accessed=bytes_accessed),
    )(x, weight, bias2d)

    # (B, C, H*W) -> (B, C, H, W): free reshape, no transpose (rearrange fused).
    return y.reshape(B, C, image_size, image_size)


def init_params(key, out_channels, embedding_dim, dtype=jnp.float32):
    # nn.Linear default init: U(-1/sqrt(in), 1/sqrt(in)) for weight and bias.
    kw, kb = jax.random.split(key)
    bound = 1.0 / (embedding_dim ** 0.5)
    weight = jax.random.uniform(
        kw, (out_channels, embedding_dim), dtype, minval=-bound, maxval=bound)
    bias = jax.random.uniform(
        kb, (out_channels,), dtype, minval=-bound, maxval=bound)
    return weight, bias


if __name__ == "__main__":
    key = jax.random.PRNGKey(0)
    k_x, k_p = jax.random.split(key)

    batch = 2
    image_size = 16
    embedding_dim = 32
    out_channels = 4
    seq = image_size * image_size  # 256

    x = jax.random.normal(k_x, (batch, seq, embedding_dim), jnp.float32)
    weight, bias = init_params(k_p, out_channels, embedding_dim)

    y = embedding2pixel_forward(x, weight, bias, image_size=image_size)
    y = jax.block_until_ready(y)

    # Reference check in plain JAX (same math as the PyTorch module).
    ref = (x @ weight.T + bias).reshape(
        batch, image_size, image_size, out_channels).transpose(0, 3, 1, 2)
    assert y.shape == (batch, out_channels, image_size, image_size)
    assert jnp.allclose(y, ref, atol=1e-5, rtol=1e-5)

    print("KERNEL_OK")
</pallas_src>

<mosaic_0001>
module attributes {stable_mosaic.version = 11 : i64} {
  func.func @_embedding2pixel_kernel(%arg0: i32, %arg1: i32, %arg2: memref<1x256x32xf32, #tpu.memory_space<vmem>>, %arg3: memref<4x32xf32, #tpu.memory_space<vmem>>, %arg4: memref<4x1xf32, #tpu.memory_space<vmem>>, %arg5: memref<1x4x256xf32, #tpu.memory_space<vmem>>) attributes {dimension_semantics = [#tpu.dimension_semantics<parallel>, #tpu.dimension_semantics<parallel>], iteration_bounds = array<i64: 2, 1>, scalar_prefetch = 0 : i64, scratch_operands = 0 : i64, tpu.core_type = #tpu.core_type<tc>, window_params = [{transform_indices = @transform_0, window_bounds = array<i64: 1, 256, 32>}, {pipeline_mode = #tpu.pipeline_mode<synchronous>, transform_indices = @transform_1, window_bounds = array<i64: 4, 32>}, {pipeline_mode = #tpu.pipeline_mode<synchronous>, transform_indices = @transform_2, window_bounds = array<i64: 4, 1>}, {transform_indices = @transform_3, window_bounds = array<i64: 1, 4, 256>}]} {
    %c0 = arith.constant 0 : index
    %c0_0 = arith.constant 0 : index
    %0 = vector.load %arg3[%c0, %c0_0] : memref<4x32xf32, #tpu.memory_space<vmem>>, vector<4x32xf32>
    %c0_1 = arith.constant 0 : index
    %c0_2 = arith.constant 0 : index
    %c0_3 = arith.constant 0 : index
    %1 = vector.load %arg2[%c0_1, %c0_2, %c0_3] : memref<1x256x32xf32, #tpu.memory_space<vmem>>, vector<1x256x32xf32>
    %2 = vector.shape_cast %1 : vector<1x256x32xf32> to vector<256x32xf32>
    %cst = arith.constant dense<0.000000e+00> : vector<4x256xf32>
    %3 = tpu.matmul %0, %2, %cst {dimension_numbers = #tpu.dot_dimension_numbers<[1], [1], [0], [0], [0, 0, 1, 0], [], []>} : vector<4x32xf32>, vector<256x32xf32>, vector<4x256xf32> -> vector<4x256xf32>
    %c0_4 = arith.constant 0 : index
    %c0_5 = arith.constant 0 : index
    %4 = vector.load %arg4[%c0_4, %c0_5] : memref<4x1xf32, #tpu.memory_space<vmem>>, vector<4x1xf32>
    %5 = vector.broadcast %4 : vector<4x1xf32> to vector<4x256xf32>
    %6 = arith.addf %3, %5 : vector<4x256xf32>
    %c0_6 = arith.constant 0 : index
    %c0_7 = arith.constant 0 : index
    %c0_8 = arith.constant 0 : index
    %7 = vector.load %arg5[%c0_6, %c0_7, %c0_8] : memref<1x4x256xf32, #tpu.memory_space<vmem>>, vector<1x4x256xf32>
    %8 = vector.shape_cast %7 : vector<1x4x256xf32> to vector<4x256xf32>
    %9 = vector.shape_cast %6 : vector<4x256xf32> to vector<1x4x256xf32>
    tpu.vector_store %arg5[%c0_6, %c0_7, %c0_8], %9 {strides = array<i32>} : memref<1x4x256xf32, #tpu.memory_space<vmem>>, vector<1x4x256xf32>,
    return
  }
  func.func @transform_0(%arg0: i32, %arg1: i32) -> (i32, i32, i32) {
    %c0_i32 = arith.constant 0 : i32
    %c0_i32_0 = arith.constant 0 : i32
    return %arg0, %arg1, %c0_i32 : i32, i32, i32
  }
  func.func @transform_1(%arg0: i32, %arg1: i32) -> (i32, i32) {
    %c0_i32 = arith.constant 0 : i32
    %c0_i32_0 = arith.constant 0 : i32
    %c0_i32_1 = arith.constant 0 : i32
    return %c0_i32, %c0_i32_0 : i32, i32
  }
  func.func @transform_2(%arg0: i32, %arg1: i32) -> (i32, i32) {
    %c0_i32 = arith.constant 0 : i32
    %c0_i32_0 = arith.constant 0 : i32
    %c0_i32_1 = arith.constant 0 : i32
    return %c0_i32, %c0_i32_0 : i32, i32
  }
  func.func @transform_3(%arg0: i32, %arg1: i32) -> (i32, i32, i32) {
    %c0_i32 = arith.constant 0 : i32
    %c0_i32_0 = arith.constant 0 : i32
    return %arg0, %c0_i32, %arg1 : i32, i32, i32
  }
}

</mosaic_0001>

<llo_original>
// kernel: embedding2pixel_forward.1
$region0: #{embedding2pixel_forward.1}
  #allocation0 [shape = 'u32[]', space=smem, size = 0x4, offset = 0x4, fixed_abs, tag = 'smem constant byte address 0x4 - core index']
  #allocation1 [shape = 'u32[144,128]{1,0:T(1,128)}', space=vmem, size = 0x12000, scoped, tag = 'internal scratch']
  %s0 = inlined_call_operand.vmem [shape: f32[2,256,32], index: 0, kind: input, shape index: {}]
  %s1 = inlined_call_operand.vmem [shape: f32[4,32], index: 1, kind: input, shape index: {}]
  %s2 = inlined_call_operand.vmem [shape: f32[4,1], index: 2, kind: input, shape index: {}]
  %s3 = inlined_call_operand.vmem [shape: f32[2,4,256], index: 3, kind: output, shape index: {}]
  %s4 = sld [smem:[#allocation0]]
  $region45: #{embedding2pixel_forward.1} parent=0
    _
  %s6 = ssub.s32 1, %s4
  %s7 = scalar_select 0, %s6, %s4
  loop: start=0, step=1, limit=4
  $region2: #{embedding2pixel_forward.1} parent=0 // loop_pre_header
    _
  $region3: #{embedding2pixel_forward.1} parent=0 // loop_header
    %s9 = sphi 0, %s13
    %p10 = scmp.ge.s32.totalorder %s9, 4
    %s16 = sphi 0, %s28
    %s17 = sphi 0, %s24
    %s18 = sphi 0, %s16
    %s19 = sphi 0, %s17
    %s20 = sphi 0, %s18
    %s21 = sphi 0, %s19
    %s33 = sphi 0, %s35
    %s36 = sphi 0, %s33
    %s37 = sphi 0, %s36
    %s53 = sphi 0, %s37
    %s57 = sphi 0, %s57
    %s59 = sphi 0, %s57
    %s60 = sphi 0, %s59
    %s74 = sphi 0, %s60
    %s78 = sphi 0, %s78
    %s80 = sphi 0, %s78
    %s81 = sphi 0, %s80
    %s95 = sphi 0, %s81
    %s103 = sphi 0, %s105
    %s106 = sphi 0, %s103
    %s107 = sphi 0, %s106
    %s123 = sphi 0, %s107
  $region4: #{embedding2pixel_forward.1} parent=0 // loop_header_branch
    %12 = sbr.rel (%p10) target = $region8
  $region5: #{embedding2pixel_forward.1} parent=0 // loop_body
    %s14 = ssub.s32 %s9, 1
    %s15 = ssub.s32 %s9, 2
    %s22 = sadd.s32 1, %s17
    %p23 = scmp.ge.s32.totalorder %s22, 1
    %s24 = scalar_select %p23, 0, %s22
    %s25 = sadd.s32 1, %s16
    %s26 = scalar_select %p23, %s25, %s16
    %p27 = scmp.ge.s32.totalorder %s26, 2
    %s28 = scalar_select %p27, 0, %s26
    %s29 = ssub.s32 %s16, %s28
    %s30 = ssub.s32 %s17, %s24
    %s31 = sor.u32 %s29, %s30
    %p32 = scmp.eq.s32.totalorder %s31, 0
    %s34 = sadd.s32 %s33, 1
    %s35 = scalar_select %p32, %s33, %s34
    %p38 = pneg %p32
    %p39 = scmp.eq.s32.totalorder %s9, 1
    %p40 = por %p38, %p39
    %p41 = scmp.ne.s32.totalorder %s33, %s36
    %p42 = scmp.eq.s32.totalorder %s9, 0
    %p43 = por %p41, %p42
    %p44 = scmp.ne.s32.totalorder %s33, %s36
    %p45 = scmp.eq.s32.totalorder %s14, 1
    %p46 = por %p44, %p45
    %p47 = scmp.ne.s32.totalorder %s36, %s37
    %p48 = scmp.eq.s32.totalorder %s14, 0
    %p49 = por %p47, %p48
    %p50 = scmp.ne.s32.totalorder %s36, %s37
    %p51 = scmp.eq.s32.totalorder %s15, 1
    %p52 = por %p50, %p51
    %p54 = scmp.ne.s32.totalorder %s37, %s53
    %p55 = scmp.eq.s32.totalorder %s15, 0
    %p56 = por %p54, %p55
    %s58 = sadd.s32 %s57, 1
    %p61 = scmp.eq.s32.totalorder %s9, 1
    %p62 = scmp.ne.s32.totalorder %s57, %s59
    %p63 = scmp.eq.s32.totalorder %s9, 0
    %p64 = por %p62, %p63
    %p65 = scmp.ne.s32.totalorder %s57, %s59
    %p66 = scmp.eq.s32.totalorder %s14, 1
    %p67 = por %p65, %p66
    %p68 = scmp.ne.s32.totalorder %s59, %s60
    %p69 = scmp.eq.s32.totalorder %s14, 0
    %p70 = por %p68, %p69
    %p71 = scmp.ne.s32.totalorder %s59, %s60
    %p72 = scmp.eq.s32.totalorder %s15, 1
    %p73 = por %p71, %p72
    %p75 = scmp.ne.s32.totalorder %s60, %s74
    %p76 = scmp.eq.s32.totalorder %s15, 0
    %p77 = por %p75, %p76
    %s79 = sadd.s32 %s78, 1
    %p82 = scmp.eq.s32.totalorder %s9, 1
    %p83 = scmp.ne.s32.totalorder %s78, %s80
    %p84 = scmp.eq.s32.totalorder %s9, 0
    %p85 = por %p83, %p84
    %p86 = scmp.ne.s32.totalorder %s78, %s80
    %p87 = scmp.eq.s32.totalorder %s14, 1
    %p88 = por %p86, %p87
    %p89 = scmp.ne.s32.totalorder %s80, %s81
    %p90 = scmp.eq.s32.totalorder %s14, 0
    %p91 = por %p89, %p90
    %p92 = scmp.ne.s32.totalorder %s80, %s81
    %p93 = scmp.eq.s32.totalorder %s15, 1
    %p94 = por %p92, %p93
    %p96 = scmp.ne.s32.totalorder %s81, %s95
    %p97 = scmp.eq.s32.totalorder %s15, 0
    %p98 = por %p96, %p97
    %s99 = ssub.s32 %s16, %s28
    %s100 = ssub.s32 %s17, %s24
    %s101 = sor.u32 %s99, %s100
    %p102 = scmp.eq.s32.totalorder %s101, 0
    %s104 = sadd.s32 %s103, 1
    %s105 = scalar_select %p102, %s103, %s104
    %p108 = pneg %p102
    %p109 = scmp.eq.s32.totalorder %s9, 1
    %p110 = por %p108, %p109
    %p111 = scmp.ne.s32.totalorder %s103, %s106
    %p112 = scmp.eq.s32.totalorder %s9, 0
    %p113 = por %p111, %p112
    %p114 = scmp.ne.s32.totalorder %s103, %s106
    %p115 = scmp.eq.s32.totalorder %s14, 1
    %p116 = por %p114, %p115
    %p117 = scmp.ne.s32.totalorder %s106, %s107
    %p118 = scmp.eq.s32.totalorder %s14, 0
    %p119 = por %p117, %p118
    %p120 = scmp.ne.s32.totalorder %s106, %s107
    %p121 = scmp.eq.s32.totalorder %s15, 1
    %p122 = por %p120, %p121
    %p124 = scmp.ne.s32.totalorder %s107, %s123
    %p125 = scmp.eq.s32.totalorder %s15, 0
    %p126 = por %p124, %p125
    %p127 = scmp.le.s32.totalorder 1, %s9
    %p128 = scmp.lt.s32.totalorder %s9, 3
    %p129 = pnand %p127, %p128
    %p130 = pneg %p129
    // Predicated region
    $region9: #{embedding2pixel_forward.1} parent=5 // pred_check
      _
    $region10: #{embedding2pixel_forward.1} parent=5 // pred_check_branch
      %132 = sbr.rel (%p129) target = $region12
    $region11: #{embedding2pixel_forward.1} parent=5 // pred_region
      %s133 = ssub.s32 %s9, 1
      // Predicated region
      $region13: #{embedding2pixel_forward.1} parent=11 // pred_check
        %p134 = pneg %p70
      $region14: #{embedding2pixel_forward.1} parent=11 // pred_check_branch
        %136 = sbr.rel (%p134) target = $region16
      $region15: #{embedding2pixel_forward.1} parent=11 // pred_region
        _
      $region16: #{embedding2pixel_forward.1} parent=11 // pred_fallthru
        _
      // Predicated region
      $region17: #{embedding2pixel_forward.1} parent=11 // pred_check
        %p137 = pneg %p91
      $region18: #{embedding2pixel_forward.1} parent=11 // pred_check_branch
        %139 = sbr.rel (%p137) target = $region20
      $region19: #{embedding2pixel_forward.1} parent=11 // pred_region
        _
      $region20: #{embedding2pixel_forward.1} parent=11 // pred_fallthru
        _
    $region12: #{embedding2pixel_forward.1} parent=5 // pred_fallthru
      _
    %p140 = scmp.lt.s32.totalorder %s9, 2
    // Predicated region
    $region21: #{embedding2pixel_forward.1} parent=5 // pred_check
      %p141 = pneg %p140
    $region22: #{embedding2pixel_forward.1} parent=5 // pred_check_branch
      %143 = sbr.rel (%p141) target = $region24
    $region23: #{embedding2pixel_forward.1} parent=5 // pred_region
      // Predicated region
      $region25: #{embedding2pixel_forward.1} parent=23 // pred_check
        %p144 = pneg %p43
      $region26: #{embedding2pixel_forward.1} parent=23 // pred_check_branch
        %146 = sbr.rel (%p144) target = $region28
      $region27: #{embedding2pixel_forward.1} parent=23 // pred_region
        %s147 = smul.u32 32, %s17
        %p148 = scmp.lt.s32.totalorder %s16, 1
        %s149 = scalar_select %p148, %s16, 1
        %p150 = scmp.lt.s32.totalorder %s147, 31
        %s151 = scalar_select %p150, %s147, 31
        %s152 = smul.addr %s149, 32
        %s153 = sadd.s32 %s151, %s152
        %s154 = smul.addr %s153, 8
        %s155 = scalar_lea.vmem %s0, %s154
        %s156 = smul.u32 32, %s17
      $region28: #{embedding2pixel_forward.1} parent=23 // pred_fallthru
        _
    $region24: #{embedding2pixel_forward.1} parent=5 // pred_fallthru
      _
    %p157 = scmp.le.s32.totalorder 1, %s9
    %p158 = scmp.lt.s32.totalorder %s9, 3
    %p159 = pnand %p157, %p158
    %p160 = pneg %p159
    // Predicated region
    $region29: #{embedding2pixel_forward.1} parent=5 // pred_check
      _
    $region30: #{embedding2pixel_forward.1} parent=5 // pred_check_branch
      %162 = sbr.rel (%p159) target = $region32
    $region31: #{embedding2pixel_forward.1} parent=5 // pred_region
      %s163 = ssub.s32 %s9, 1
      %s164 = smul.u32 32, %s19
      %p165 = scmp.lt.s32.totalorder %s18, 1
      %s166 = scalar_select %p165, %s18, 1
      %p167 = scmp.lt.s32.totalorder %s164, 31
      %s168 = scalar_select %p167, %s164, 31
      %s169 = smul.addr %s166, 32
      %s170 = sadd.s32 %s168, %s169
      %s171 = smul.addr %s170, 8
      %s172 = scalar_lea.vmem %s0, %s171
      %p173 = pneg %p49
      %p174 = pneg %p46
      %p175 = pneg %p70
      %p176 = pneg %p67
      %p177 = pneg %p91
      %p178 = pneg %p88
      %p179 = pneg %p119
      %p180 = pneg %p116
      %s181 = smul.u32 2, %s19
      %p182 = scmp.lt.s32.totalorder %s18, 1
      %s183 = scalar_select %p182, %s18, 1
      %p184 = scmp.lt.s32.totalorder %s181, 1
      %s185 = scalar_select %p184, %s181, 1
      %s186 = smul.addr %s183, 2
      %s187 = sadd.s32 %s185, %s186
      %s188 = smul.addr %s187, 4
      %s189 = scalar_lea.vmem %s3, %s188
      %s190 = smul.u32 32, %s19
      %p191 = scmp.lt.s32.totalorder %s18, 1
      %s192 = scalar_select %p191, %s18, 1
      %p193 = scmp.lt.s32.totalorder %s190, 31
      %s194 = scalar_select %p193, %s190, 31
      %s195 = smul.addr %s192, 32
      %s196 = sadd.s32 %s194, %s195
      %s197 = smul.addr %s196, 8
      %s198 = scalar_lea.vmem %s0, %s197
      %s199 = smul.u32 32, %s19
      %s200 = smul.u32 2, %s19
      %p201 = scmp.lt.s32.totalorder %s18, 1
      %s202 = scalar_select %p201, %s18, 1
      %p203 = scmp.lt.s32.totalorder %s200, 1
      %s204 = scalar_select %p203, %s200, 1
      %s205 = smul.addr %s202, 2
      %s206 = sadd.s32 %s204, %s205
      %s207 = smul.addr %s206, 4
      %s208 = scalar_lea.vmem %s3, %s207
      %s209 = smul.u32 2, %s19
      %v210 = vld [vmem:[%s1] sm:$0xf]
      %v211 = vld [vmem:[%s198] sm:$0xff]
      %v212 = vld [vmem:[%s198 + $0x8] sm:$0xff]
      %v213 = vld [vmem:[%s198 + $0x10] sm:$0xff]
      %v214 = vld [vmem:[%s198 + $0x18] sm:$0xff]
      %v215 = vld [vmem:[%s198 + $0x20] sm:$0xff]
      %v216 = vld [vmem:[%s198 + $0x28] sm:$0xff]
      %v217 = vld [vmem:[%s198 + $0x30] sm:$0xff]
      %v218 = vld [vmem:[%s198 + $0x38] sm:$0xff]
      %v219 = vld [vmem:[%s198 + $0x40] sm:$0xff]
      %v220 = vld [vmem:[%s198 + $0x48] sm:$0xff]
      %v221 = vld [vmem:[%s198 + $0x50] sm:$0xff]
      %v222 = vld [vmem:[%s198 + $0x58] sm:$0xff]
      %v223 = vld [vmem:[%s198 + $0x60] sm:$0xff]
      %v224 = vld [vmem:[%s198 + $0x68] sm:$0xff]
      %v225 = vld [vmem:[%s198 + $0x70] sm:$0xff]
      %v226 = vld [vmem:[%s198 + $0x78] sm:$0xff]
      %v227 = vld [vmem:[%s198 + $0x80] sm:$0xff]
      %v228 = vld [vmem:[%s198 + $0x88] sm:$0xff]
      %v229 = vld [vmem:[%s198 + $0x90] sm:$0xff]
      %v230 = vld [vmem:[%s198 + $0x98] sm:$0xff]
      %v231 = vld [vmem:[%s198 + $0xa0] sm:$0xff]
      %v232 = vld [vmem:[%s198 + $0xa8] sm:$0xff]
      %v233 = vld [vmem:[%s198 + $0xb0] sm:$0xff]
      %v234 = vld [vmem:[%s198 + $0xb8] sm:$0xff]
      %v235 = vld [vmem:[%s198 + $0xc0] sm:$0xff]
      %v236 = vld [vmem:[%s198 + $0xc8] sm:$0xff]
      %v237 = vld [vmem:[%s198 + $0xd0] sm:$0xff]
      %v238 = vld [vmem:[%s198 + $0xd8] sm:$0xff]
      %v239 = vld [vmem:[%s198 + $0xe0] sm:$0xff]
      %v240 = vld [vmem:[%s198 + $0xe8] sm:$0xff]
      %v241 = vld [vmem:[%s198 + $0xf0] sm:$0xff]
      %v242 = vld [vmem:[%s198 + $0xf8] sm:$0xff]
      %v243 = vld [vmem:[%s2] sm:$0xf]
      %245 = vset.pattern.permute.xlu0 0
      %246 = vperm.xlu0 %245, %v243
      %v247 = vpop.permute.xlu0 %246
      %vm249 = vcmask 261120
      %v251 = vsel %vm249, %v210, 0
      %v254 = vsel %vm249, %v211, 0
      %v257 = vsel %vm249, %v212, 0
      %v260 = vsel %vm249, %v213, 0
      %v263 = vsel %vm249, %v214, 0
      %v266 = vsel %vm249, %v215, 0
      %v269 = vsel %vm249, %v216, 0
      %v272 = vsel %vm249, %v217, 0
      %v275 = vsel %vm249, %v218, 0
      %v278 = vsel %vm249, %v219, 0
      %v281 = vsel %vm249, %v220, 0
      %v284 = vsel %vm249, %v221, 0
      %v287 = vsel %vm249, %v222, 0
      %v290 = vsel %vm249, %v223, 0
      %v293 = vsel %vm249, %v224, 0
      %v296 = vsel %vm249, %v225, 0
      %v299 = vsel %vm249, %v226, 0
      %v302 = vsel %vm249, %v227, 0
      %v305 = vsel %vm249, %v228, 0
      %v308 = vsel %vm249, %v229, 0
      %v311 = vsel %vm249, %v230, 0
      %v314 = vsel %vm249, %v231, 0
      %v317 = vsel %vm249, %v232, 0
      %v320 = vsel %vm249, %v233, 0
      %v323 = vsel %vm249, %v234, 0
      %v326 = vsel %vm249, %v235, 0
      %v329 = vsel %vm249, %v236, 0
      %v332 = vsel %vm249, %v237, 0
      %v335 = vsel %vm249, %v238, 0
      %v338 = vsel %vm249, %v239, 0
      %v341 = vsel %vm249, %v240, 0
      %v344 = vsel %vm249, %v241, 0
      %v347 = vsel %vm249, %v242, 0
      %349 = vmatprep.subr.mxu0 0.0
      %350 = vmatpush1.xpose.msra.mxu0 %v254
      %351 = vmatprep.subr.mxu0 0.0
      %352 = vmatpush1.xpose.msra.mxu0 %v257
      %353 = vmatprep.subr.mxu0 0.0
      %354 = vmatpush1.xpose.msra.mxu0 %v260
      %355 = vmatprep.subr.mxu0 0.0
      %356 = vmatpush1.xpose.msra.mxu0 %v263
      %357 = vmatprep.subr.mxu0 0.0
      %358 = vmatpush1.xpose.msra.mxu0 %v266
      %359 = vmatprep.subr.mxu0 0.0
      %360 = vmatpush1.xpose.msra.mxu0 %v269
      %361 = vmatprep.subr.mxu0 0.0
      %362 = vmatpush1.xpose.msra.mxu0 %v272
      %363 = vmatprep.subr.mxu0 0.0
      %364 = vmatpush1.xpose.msra.mxu0 %v275
      %365 = vmatprep.subr.mxu0 0.0
      %366 = vmatpush1.xpose.msra.mxu0 %v278
      %367 = vmatprep.subr.mxu0 0.0
      %368 = vmatpush1.xpose.msra.mxu0 %v281
      %369 = vmatprep.subr.mxu0 0.0
      %370 = vmatpush1.xpose.msra.mxu0 %v284
      %371 = vmatprep.subr.mxu0 0.0
      %372 = vmatpush1.xpose.msra.mxu0 %v287
      %373 = vmatprep.subr.mxu0 0.0
      %374 = vmatpush1.xpose.msra.mxu0 %v290
      %375 = vmatprep.subr.mxu0 0.0
      %376 = vmatpush1.xpose.msra.mxu0 %v293
      %377 = vmatprep.subr.mxu0 0.0
      %378 = vmatpush1.xpose.msra.mxu0 %v296
      %379 = vmatprep.subr.mxu0 0.0
      %380 = vmatpush1.xpose.msra.mxu0 %v299
      %381 = vmatprep.subr.mxu0 0.0
      %382 = vmatpush1.xpose.msra.mxu0 %v302
      %383 = vmatprep.subr.mxu0 0.0
      %384 = vmatpush1.xpose.msra.mxu0 %v305
      %385 = vmatprep.subr.mxu0 0.0
      %386 = vmatpush1.xpose.msra.mxu0 %v308
      %387 = vmatprep.subr.mxu0 0.0
      %388 = vmatpush1.xpose.msra.mxu0 %v311
      %389 = vmatprep.subr.mxu0 0.0
      %390 = vmatpush1.xpose.msra.mxu0 %v314
      %391 = vmatprep.subr.mxu0 0.0
      %392 = vmatpush1.xpose.msra.mxu0 %v317
      %393 = vmatprep.subr.mxu0 0.0
      %394 = vmatpush1.xpose.msra.mxu0 %v320
      %395 = vmatprep.subr.mxu0 0.0
      %396 = vmatpush1.xpose.msra.mxu0 %v323
      %397 = vmatprep.subr.mxu0 0.0
      %398 = vmatpush1.xpose.msra.mxu0 %v326
      %399 = vmatprep.subr.mxu0 0.0
      %400 = vmatpush1.xpose.msra.mxu0 %v329
      %401 = vmatprep.subr.mxu0 0.0
      %402 = vmatpush1.xpose.msra.mxu0 %v332
      %403 = vmatprep.subr.mxu0 0.0
      %404 = vmatpush1.xpose.msra.mxu0 %v335
      %405 = vmatprep.subr.mxu0 0.0
      %406 = vmatpush1.xpose.msra.mxu0 %v338
      %407 = vmatprep.subr.mxu0 0.0
      %408 = vmatpush1.xpose.msra.mxu0 %v341
      %409 = vmatprep.subr.mxu0 0.0
      %410 = vmatpush1.xpose.msra.mxu0 %v344
      %411 = vmatprep.subr.mxu0 0.0
      %412 = vmatpush1.xpose.msra.mxu0 %v347
      %413 = vmatprep.mubr.f32.mxu0 0.0
      %414 = vmatmul.mubr.f32.gmra.mrb[0].mxu0 %v251
      %v415 = vpop.f32.mrb[0].mxu0
      %v416 = vadd.f32 %v247, %v415
      %v417 = vpop.f32.mrb[0].mxu0
      %v418 = vadd.f32 %v247, %v417
      %419 = vdwg.mxu0
      %v422 = vcombine.low %v416, %v418
      %424 = vst [vmem:[%s208] sm:$0xff] %v422
      %s425 = smul.u32 2, %s19
      %p426 = scmp.lt.s32.totalorder %s18, 1
      %s427 = scalar_select %p426, %s18, 1
      %p428 = scmp.lt.s32.totalorder %s425, 1
      %s429 = scalar_select %p428, %s425, 1
      %s430 = smul.addr %s427, 2
      %s431 = sadd.s32 %s429, %s430
      %s432 = smul.addr %s431, 4
      %s433 = scalar_lea.vmem %s3, %s432
      // Predicated region
      $region33: #{embedding2pixel_forward.1} parent=31 // pred_check
        %p434 = pneg %p116
      $region34: #{embedding2pixel_forward.1} parent=31 // pred_check_branch
        %436 = sbr.rel (%p434) target = $region36
      $region35: #{embedding2pixel_forward.1} parent=31 // pred_region
        %s437 = smul.u32 2, %s19
      $region36: #{embedding2pixel_forward.1} parent=31 // pred_fallthru
        _
    $region32: #{embedding2pixel_forward.1} parent=5 // pred_fallthru
      _
    %p438 = scmp.le.s32.totalorder 2, %s9
    // Predicated region
    $region37: #{embedding2pixel_forward.1} parent=5 // pred_check
      %p439 = pneg %p438
    $region38: #{embedding2pixel_forward.1} parent=5 // pred_check_branch
      %441 = sbr.rel (%p439) target = $region40
    $region39: #{embedding2pixel_forward.1} parent=5 // pred_region
      %s442 = ssub.s32 %s9, 2
      // Predicated region
      $region41: #{embedding2pixel_forward.1} parent=39 // pred_check
        %p443 = pneg %p122
      $region42: #{embedding2pixel_forward.1} parent=39 // pred_check_branch
        %445 = sbr.rel (%p443) target = $region44
      $region43: #{embedding2pixel_forward.1} parent=39 // pred_region
        %s446 = smul.u32 2, %s21
        %p447 = scmp.lt.s32.totalorder %s20, 1
        %s448 = scalar_select %p447, %s20, 1
        %p449 = scmp.lt.s32.totalorder %s446, 1
        %s450 = scalar_select %p449, %s446, 1
        %s451 = smul.addr %s448, 2
        %s452 = sadd.s32 %s450, %s451
        %s453 = smul.addr %s452, 4
        %s454 = scalar_lea.vmem %s3, %s453
      $region44: #{embedding2pixel_forward.1} parent=39 // pred_fallthru
        _
    $region40: #{embedding2pixel_forward.1} parent=5 // pred_fallthru
      _
  $region6: #{embedding2pixel_forward.1} parent=0 // loop_footer
    %s13 = sadd.s32 1, %s9
  $region7: #{embedding2pixel_forward.1} parent=0 // loop_footer_branch
    %8 = sbr.rel target = $region3
  $region8: #{embedding2pixel_forward.1} parent=0 // loop_exit
    _

</llo_original>
